<compile_context>
chip_gen: v7x
topology: tpu7x:2x2x1
jax: 0.10.0
libtpu: 0.0.40
codegen_flags: <defaults>
</compile_context>

<pallas_src>
import functools

import jax
import jax.numpy as jnp
from jax.experimental import pallas as pl
from jax.experimental.pallas import tpu as pltpu


def _round_up(x: int, m: int) -> int:
    return ((x + m - 1) // m) * m


def _pad2(x, rows: int, cols: int):
    return jnp.pad(x, ((0, rows - x.shape[0]), (0, cols - x.shape[1])))


# ----------------------------------------------------------------------------
# Pallas kernels: two row-tiled passes (hop-1, hop-2 + residual LayerNorm)
# ----------------------------------------------------------------------------
def _gnn_hop1_kernel(a_ref, x_ref, w1_ref, b1_ref, h1_ref):
    # a_ref: (TM, N_pad) bf16 row block of normalized adjacency
    # x_ref: (N_pad, D_pad) bf16 full node table (constant index -> resident)
    agg = jnp.dot(a_ref[...], x_ref[...],
                  preferred_element_type=jnp.float32)              # [TM, D] f32
    h = jnp.dot(agg.astype(jnp.bfloat16), w1_ref[...],
                preferred_element_type=jnp.float32)                # [TM, D] f32
    h = jnp.maximum(h + b1_ref[...], 0.0)                          # relu (f32)
    h1_ref[...] = h.astype(jnp.bfloat16)


def _gnn_hop2_ln_kernel(a_ref, h1_ref, x_ref, w2_ref, b2_ref,
                        gamma_ref, beta_ref, o_ref, *, d_real: int):
    agg = jnp.dot(a_ref[...], h1_ref[...],
                  preferred_element_type=jnp.float32)              # [TM, D] f32
    h2 = jnp.dot(agg.astype(jnp.bfloat16), w2_ref[...],
                 preferred_element_type=jnp.float32)
    # Padded lanes of b2 / x are zero, so padded lanes of y are exactly zero.
    y = h2 + b2_ref[...] + x_ref[...]                              # residual (f32)

    inv_d = 1.0 / float(d_real)
    mean = jnp.sum(y, axis=-1, keepdims=True) * inv_d
    lane = jax.lax.broadcasted_iota(jnp.int32, y.shape, 1)
    valid = (lane < d_real).astype(jnp.float32)
    cen = (y - mean) * valid
    var = jnp.sum(cen * cen, axis=-1, keepdims=True) * inv_d
    norm = cen * jax.lax.rsqrt(var + 1e-5)
    o_ref[...] = norm * gamma_ref[...] + beta_ref[...]


# ----------------------------------------------------------------------------
# Wrapper: ASTEncoder.forward (GNN branch)
# ----------------------------------------------------------------------------
def ast_encoder_gnn_forward(ast_nodes_encodings, a_norm, params):
    """Pallas-backed ASTEncoder.forward for the GNN branch.

    ast_nodes_encodings: [num_nodes, D] float32
    a_norm:              [num_nodes, num_nodes] float32 dense normalized adjacency
    params:              dict with w1, b1, w2, b2, gamma, beta
    returns dict mimicking CodeExpressionEncodingsTensors(ast_nodes=...)
    """
    n, d = ast_nodes_encodings.shape

    # Lane-dense embedding dim; sublane/row dim padded to a multiple of 128 so
    # a nice row-tile size always divides it.
    d_pad = _round_up(d, 128)
    n_pad = _round_up(n, 128)
    tm = 128
    for cand in (512, 256, 128):
        if n_pad % cand == 0:
            tm = cand
            break
    nb = n_pad // tm

    # ---- pad + cast operands (one-time XLA ops outside the kernel) ----------
    x_f32 = _pad2(ast_nodes_encodings.astype(jnp.float32), n_pad, d_pad)
    x_bf16 = x_f32.astype(jnp.bfloat16)
    a_bf16 = _pad2(a_norm.astype(jnp.float32), n_pad, n_pad).astype(jnp.bfloat16)
    w1 = _pad2(params["w1"], d_pad, d_pad).astype(jnp.bfloat16)
    w2 = _pad2(params["w2"], d_pad, d_pad).astype(jnp.bfloat16)
    b1 = _pad2(params["b1"].astype(jnp.float32), 1, d_pad)
    b2 = _pad2(params["b2"].astype(jnp.float32), 1, d_pad)
    gamma = _pad2(params["gamma"].astype(jnp.float32), 1, d_pad)
    beta = _pad2(params["beta"].astype(jnp.float32), 1, d_pad)

    row_block = pl.BlockSpec((tm, n_pad), lambda i: (i, 0))        # A row tile
    full_nodes_bf16 = pl.BlockSpec((n_pad, d_pad), lambda i: (0, 0))
    w_block = pl.BlockSpec((d_pad, d_pad), lambda i: (0, 0))
    vec_block = pl.BlockSpec((1, d_pad), lambda i: (0, 0))
    out_row_block = pl.BlockSpec((tm, d_pad), lambda i: (i, 0))

    compiler_params = pltpu.CompilerParams(
        dimension_semantics=("parallel",),
        vmem_limit_bytes=48 * 1024 * 1024,
    )

    # ---- hop 1: H1 = relu(A @ X @ W1 + b1) ----------------------------------
    h1 = pl.pallas_call(
        _gnn_hop1_kernel,
        out_shape=jax.ShapeDtypeStruct((n_pad, d_pad), jnp.bfloat16),
        grid=(nb,),
        in_specs=[row_block, full_nodes_bf16, w_block, vec_block],
        out_specs=out_row_block,
        compiler_params=compiler_params,
    )(a_bf16, x_bf16, w1, b1)

    # ---- hop 2 + residual LayerNorm -----------------------------------------
    out_pad = pl.pallas_call(
        functools.partial(_gnn_hop2_ln_kernel, d_real=d),
        out_shape=jax.ShapeDtypeStruct((n_pad, d_pad), jnp.float32),
        grid=(nb,),
        in_specs=[row_block, full_nodes_bf16, out_row_block,  # A, H1(full), X row
                  w_block, vec_block, vec_block, vec_block],
        out_specs=out_row_block,
        compiler_params=compiler_params,
    )(a_bf16, h1, x_f32, w2, b2, gamma, beta)

    new_nodes = out_pad[:n, :d]
    # Mirrors `return CodeExpressionEncodingsTensors(ast_nodes=new_ast_nodes_encodings)`
    return {"ast_nodes": new_nodes}


# ----------------------------------------------------------------------------
# Glue: deterministic params + dense GCN-normalized adjacency from edge_index
# ----------------------------------------------------------------------------
def init_params(key, d):
    k1, k2, k3, k4 = jax.random.split(key, 4)
    scale = 1.0 / jnp.sqrt(jnp.float32(d))
    return {
        "w1": jax.random.normal(k1, (d, d), jnp.float32) * scale,
        "b1": jax.random.normal(k2, (1, d), jnp.float32) * 0.01,
        "w2": jax.random.normal(k3, (d, d), jnp.float32) * scale,
        "b2": jax.random.normal(k4, (1, d), jnp.float32) * 0.01,
        "gamma": jnp.ones((1, d), jnp.float32),
        "beta": jnp.zeros((1, d), jnp.float32),
    }


def build_normalized_adjacency(edge_index, num_nodes):
    """Dense GCN normalization: A_hat = D^-1/2 (A + I) D^-1/2 (symmetrized)."""
    src, dst = edge_index
    a = jnp.zeros((num_nodes, num_nodes), jnp.float32)
    a = a.at[src, dst].set(1.0)
    a = jnp.maximum(a, a.T)                        # undirected message passing
    a = a + jnp.eye(num_nodes, dtype=jnp.float32)  # self loops
    deg = jnp.sum(a, axis=-1)
    dinv = jax.lax.rsqrt(jnp.maximum(deg, 1.0))
    return a * dinv[:, None] * dinv[None, :]


def _gnn_reference(x, a, p):
    """Pure-JAX f32 reference for validation."""
    h1 = jnp.maximum(a @ x @ p["w1"] + p["b1"], 0.0)
    h2 = a @ h1 @ p["w2"] + p["b2"]
    y = h2 + x
    mean = jnp.mean(y, axis=-1, keepdims=True)
    var = jnp.mean((y - mean) ** 2, axis=-1, keepdims=True)
    return (y - mean) * jax.lax.rsqrt(var + 1e-5) * p["gamma"] + p["beta"]


if __name__ == "__main__":
    key = jax.random.PRNGKey(0)
    ast_node_embedding_dim = 32      # encoder_params.ast_node_embedding_dim
    graphs = 4                       # batch of ASTs packed block-diagonally
    nodes_per_graph = 96
    num_nodes = graphs * nodes_per_graph          # 384 total AST nodes

    k_x, k_e, k_p = jax.random.split(key, 3)

    # previous_code_expression_encodings.ast_nodes : [num_nodes, D]
    ast_nodes = jax.random.normal(
        k_x, (num_nodes, ast_node_embedding_dim), jnp.float32)

    # sub_ast_input.pyg_graph edge_index: random AST-like edges per graph,
    # offset so the batch forms one block-diagonal adjacency.
    edges_per_graph = 192
    src_list, dst_list = [], []
    for g in range(graphs):
        kg = jax.random.fold_in(k_e, g)
        s = jax.random.randint(kg, (edges_per_graph,), 0, nodes_per_graph)
        t = (s + 1 + jax.random.randint(
            jax.random.fold_in(kg, 1000), (edges_per_graph,), 0,
            nodes_per_graph - 1)) % nodes_per_graph
        src_list.append(s + g * nodes_per_graph)
        dst_list.append(t + g * nodes_per_graph)
    src = jnp.concatenate(src_list)
    dst = jnp.concatenate(dst_list)
    a_norm = build_normalized_adjacency((src, dst), num_nodes)

    params = init_params(k_p, ast_node_embedding_dim)

    out = ast_encoder_gnn_forward(ast_nodes, a_norm, params)
    new_nodes = out["ast_nodes"]
    jax.block_until_ready(new_nodes)

    assert new_nodes.shape == (num_nodes, ast_node_embedding_dim)
    assert new_nodes.dtype == jnp.float32
    assert bool(jnp.all(jnp.isfinite(new_nodes)))

    # Validate bf16-MXU kernel against the f32 reference (loose tolerance
    # because matmul operands are bf16; LayerNorm output is O(1)).
    ref = _gnn_reference(ast_nodes, a_norm, params)
    max_err = float(jnp.max(jnp.abs(new_nodes - ref)))
    assert max_err < 0.25, f"max abs err vs f32 reference too large: {max_err}"

    print("KERNEL_OK")
</pallas_src>

<mosaic_0001>
module attributes {stable_mosaic.version = 11 : i64} {
  func.func @_gnn_hop1_kernel(%arg0: i32, %arg1: memref<128x384xbf16, #tpu.memory_space<vmem>>, %arg2: memref<384x128xbf16, #tpu.memory_space<vmem>>, %arg3: memref<128x128xbf16, #tpu.memory_space<vmem>>, %arg4: memref<1x128xf32, #tpu.memory_space<vmem>>, %arg5: memref<128x128xbf16, #tpu.memory_space<vmem>>) attributes {dimension_semantics = [#tpu.dimension_semantics<parallel>], iteration_bounds = array<i64: 3>, scalar_prefetch = 0 : i64, scratch_operands = 0 : i64, tpu.core_type = #tpu.core_type<tc>, window_params = [{transform_indices = @transform_0, window_bounds = array<i64: 128, 384>}, {pipeline_mode = #tpu.pipeline_mode<synchronous>, transform_indices = @transform_1, window_bounds = array<i64: 384, 128>}, {pipeline_mode = #tpu.pipeline_mode<synchronous>, transform_indices = @transform_2, window_bounds = array<i64: 128, 128>}, {pipeline_mode = #tpu.pipeline_mode<synchronous>, transform_indices = @transform_3, window_bounds = array<i64: 1, 128>}, {transform_indices = @transform_4, window_bounds = array<i64: 128, 128>}]} {
    %c0 = arith.constant 0 : index
    %c0_0 = arith.constant 0 : index
    %0 = vector.load %arg1[%c0, %c0_0] : memref<128x384xbf16, #tpu.memory_space<vmem>>, vector<128x384xbf16>
    %c0_1 = arith.constant 0 : index
    %c0_2 = arith.constant 0 : index
    %1 = vector.load %arg2[%c0_1, %c0_2] : memref<384x128xbf16, #tpu.memory_space<vmem>>, vector<384x128xbf16>
    %cst = arith.constant dense<0.000000e+00> : vector<128x128xf32>
    %2 = tpu.matmul %0, %1, %cst {dimension_numbers = #tpu.dot_dimension_numbers<[1], [0], [0], [1], [0, 0, 1, 1], [], []>} : vector<128x384xbf16>, vector<384x128xbf16>, vector<128x128xf32> -> vector<128x128xf32>
    %3 = arith.truncf %2 : vector<128x128xf32> to vector<128x128xbf16>
    %c0_3 = arith.constant 0 : index
    %c0_4 = arith.constant 0 : index
    %4 = vector.load %arg3[%c0_3, %c0_4] : memref<128x128xbf16, #tpu.memory_space<vmem>>, vector<128x128xbf16>
    %cst_5 = arith.constant dense<0.000000e+00> : vector<128x128xf32>
    %5 = tpu.matmul %3, %4, %cst_5 {dimension_numbers = #tpu.dot_dimension_numbers<[1], [0], [0], [1], [0, 0, 1, 1], [], []>} : vector<128x128xbf16>, vector<128x128xbf16>, vector<128x128xf32> -> vector<128x128xf32>
    %c0_6 = arith.constant 0 : index
    %c0_7 = arith.constant 0 : index
    %6 = vector.load %arg4[%c0_6, %c0_7] : memref<1x128xf32, #tpu.memory_space<vmem>>, vector<1x128xf32>
    %7 = vector.broadcast %6 : vector<1x128xf32> to vector<128x128xf32>
    %8 = arith.addf %5, %7 : vector<128x128xf32>
    %cst_8 = arith.constant 0.000000e+00 : f32
    %9 = vector.broadcast %cst_8 : f32 to vector<128x128xf32>
    %10 = arith.maximumf %8, %9 : vector<128x128xf32>
    %11 = arith.truncf %10 : vector<128x128xf32> to vector<128x128xbf16>
    %c0_9 = arith.constant 0 : index
    %c0_10 = arith.constant 0 : index
    %12 = vector.load %arg5[%c0_9, %c0_10] : memref<128x128xbf16, #tpu.memory_space<vmem>>, vector<128x128xbf16>
    tpu.vector_store %arg5[%c0_9, %c0_10], %11 {strides = array<i32>} : memref<128x128xbf16, #tpu.memory_space<vmem>>, vector<128x128xbf16>,
    return
  }
  func.func @transform_0(%arg0: i32) -> (i32, i32) {
    %c0_i32 = arith.constant 0 : i32
    %c0_i32_0 = arith.constant 0 : i32
    return %arg0, %c0_i32 : i32, i32
  }
  func.func @transform_1(%arg0: i32) -> (i32, i32) {
    %c0_i32 = arith.constant 0 : i32
    %c0_i32_0 = arith.constant 0 : i32
    %c0_i32_1 = arith.constant 0 : i32
    return %c0_i32, %c0_i32_0 : i32, i32
  }
  func.func @transform_2(%arg0: i32) -> (i32, i32) {
    %c0_i32 = arith.constant 0 : i32
    %c0_i32_0 = arith.constant 0 : i32
    %c0_i32_1 = arith.constant 0 : i32
    return %c0_i32, %c0_i32_0 : i32, i32
  }
  func.func @transform_3(%arg0: i32) -> (i32, i32) {
    %c0_i32 = arith.constant 0 : i32
    %c0_i32_0 = arith.constant 0 : i32
    %c0_i32_1 = arith.constant 0 : i32
    return %c0_i32, %c0_i32_0 : i32, i32
  }
  func.func @transform_4(%arg0: i32) -> (i32, i32) {
    %c0_i32 = arith.constant 0 : i32
    %c0_i32_0 = arith.constant 0 : i32
    return %arg0, %c0_i32 : i32, i32
  }
}

</mosaic_0001>

<llo_original>
// kernel: tpu_custom_call.1
$region0: #{tpu_custom_call.1}
  #allocation0 [shape = 'u32[]', space=smem, size = 0x4, offset = 0x4, fixed_abs, tag = 'smem constant byte address 0x4 - core index']
  #allocation1 [shape = 'u32[144,128]{1,0:T(1,128)}', space=vmem, size = 0x12000, scoped, tag = 'internal scratch']
  %s0 = inlined_call_operand.hbm [shape: bf16[384,384], index: 0, kind: input, shape index: {}]
  %s1 = inlined_call_operand.hbm [shape: bf16[384,128], index: 1, kind: input, shape index: {}]
  %s2 = inlined_call_operand.hbm [shape: bf16[128,128], index: 2, kind: input, shape index: {}]
  %s3 = inlined_call_operand.vmem [shape: f32[1,128], index: 3, kind: input, shape index: {}]
  %s4 = inlined_call_operand.hbm [shape: bf16[384,128], index: 4, kind: output, shape index: {}]
  %s5 = sld [smem:[#allocation0]]
  $region61: #{tpu_custom_call.1} parent=0
    _
  %s7 = ssub.s32 1, %s5
  %s8 = scalar_select 0, %s7, %s5
  $region1: #{tpu_custom_call.1} parent=0
    #allocation2 [shape = 'u8[196608]{0}', space=vmem, size = 0x30000, scoped, tag = 'input window, operand 0']
    #allocation3 [shape = 's32[2]{0}', space=sflag, size = 0x8, scoped, tag = 'scoped memory for tpu_custom_call.1']
    #allocation4 [shape = 's32[2]{0}', space=sflag, size = 0x8, scoped, tag = 'scoped memory for tpu_custom_call.1']
    #allocation5 [shape = 'u8[98304]{0}', space=vmem, size = 0x18000, scoped, tag = 'input window, operand 1, single buffered']
    #allocation6 [shape = 's32[1]{0}', space=sflag, size = 0x4, scoped, tag = 'scoped memory for tpu_custom_call.1']
    #allocation7 [shape = 'u8[32768]{0}', space=vmem, size = 0x8000, scoped, tag = 'input window, operand 2, single buffered']
    #allocation8 [shape = 'u8[65536]{0}', space=vmem, size = 0x10000, scoped, tag = 'output window, operand 0']
    %9 = vsyncpa [#allocation3], 0
    %s10 = scalar_lea.sflag [#allocation3], 1
    %11 = vsyncpa %s10, 0
    %12 = vsyncpa [#allocation6], 0
    %13 = vsyncpa [#allocation4], 0
    %s14 = scalar_lea.sflag [#allocation4], 1
    %15 = vsyncpa %s14, 0
    loop: start=0, step=1, limit=5
    $region2: #{tpu_custom_call.1} parent=1 // loop_pre_header
      _
    $region3: #{tpu_custom_call.1} parent=1 // loop_header
      %s17 = sphi 0, %s21
      %p18 = scmp.ge.s32.totalorder %s17, 5
      %s27 = sphi 0, %s29
      %s30 = sphi 0, %s27
      %s31 = sphi 0, %s30
      %s47 = sphi 0, %s31
      %s51 = sphi 0, %s51
      %s53 = sphi 0, %s51
      %s54 = sphi 0, %s53
      %s68 = sphi 0, %s54
      %s72 = sphi 0, %s72
      %s74 = sphi 0, %s72
      %s75 = sphi 0, %s74
      %s89 = sphi 0, %s75
      %s93 = sphi 0, %s93
      %s95 = sphi 0, %s93
      %s96 = sphi 0, %s95
      %s110 = sphi 0, %s96
      %s116 = sphi 0, %s118
      %s119 = sphi 0, %s116
      %s120 = sphi 0, %s119
      %s136 = sphi 0, %s120
    $region4: #{tpu_custom_call.1} parent=1 // loop_header_branch
      %20 = sbr.rel (%p18) target = $region8
    $region5: #{tpu_custom_call.1} parent=1 // loop_body
      %s22 = ssub.s32 %s17, 1
      %s23 = ssub.s32 %s17, 2
      %s24 = sadd.s32 %s17, 1
      %s25 = ssub.s32 %s17, %s24
      %p26 = scmp.eq.s32.totalorder %s25, 0
      %s28 = sadd.s32 %s27, 1
      %s29 = scalar_select %p26, %s27, %s28
      %p32 = pneg %p26
      %p33 = scmp.eq.s32.totalorder %s17, 2
      %p34 = por %p32, %p33
      %p35 = scmp.ne.s32.totalorder %s27, %s30
      %p36 = scmp.eq.s32.totalorder %s17, 0
      %p37 = por %p35, %p36
      %p38 = scmp.ne.s32.totalorder %s27, %s30
      %p39 = scmp.eq.s32.totalorder %s22, 2
      %p40 = por %p38, %p39
      %p41 = scmp.ne.s32.totalorder %s30, %s31
      %p42 = scmp.eq.s32.totalorder %s22, 0
      %p43 = por %p41, %p42
      %p44 = scmp.ne.s32.totalorder %s30, %s31
      %p45 = scmp.eq.s32.totalorder %s23, 2
      %p46 = por %p44, %p45
      %p48 = scmp.ne.s32.totalorder %s31, %s47
      %p49 = scmp.eq.s32.totalorder %s23, 0
      %p50 = por %p48, %p49
      %s52 = sadd.s32 %s51, 1
      %p55 = scmp.eq.s32.totalorder %s17, 2
      %p56 = scmp.ne.s32.totalorder %s51, %s53
      %p57 = scmp.eq.s32.totalorder %s17, 0
      %p58 = por %p56, %p57
      %p59 = scmp.ne.s32.totalorder %s51, %s53
      %p60 = scmp.eq.s32.totalorder %s22, 2
      %p61 = por %p59, %p60
      %p62 = scmp.ne.s32.totalorder %s53, %s54
      %p63 = scmp.eq.s32.totalorder %s22, 0
      %p64 = por %p62, %p63
      %p65 = scmp.ne.s32.totalorder %s53, %s54
      %p66 = scmp.eq.s32.totalorder %s23, 2
      %p67 = por %p65, %p66
      %p69 = scmp.ne.s32.totalorder %s54, %s68
      %p70 = scmp.eq.s32.totalorder %s23, 0
      %p71 = por %p69, %p70
      %s73 = sadd.s32 %s72, 1
      %p76 = scmp.eq.s32.totalorder %s17, 2
      %p77 = scmp.ne.s32.totalorder %s72, %s74
      %p78 = scmp.eq.s32.totalorder %s17, 0
      %p79 = por %p77, %p78
      %p80 = scmp.ne.s32.totalorder %s72, %s74
      %p81 = scmp.eq.s32.totalorder %s22, 2
      %p82 = por %p80, %p81
      %p83 = scmp.ne.s32.totalorder %s74, %s75
      %p84 = scmp.eq.s32.totalorder %s22, 0
      %p85 = por %p83, %p84
      %p86 = scmp.ne.s32.totalorder %s74, %s75
      %p87 = scmp.eq.s32.totalorder %s23, 2
      %p88 = por %p86, %p87
      %p90 = scmp.ne.s32.totalorder %s75, %s89
      %p91 = scmp.eq.s32.totalorder %s23, 0
      %p92 = por %p90, %p91
      %s94 = sadd.s32 %s93, 1
      %p97 = scmp.eq.s32.totalorder %s17, 2
      %p98 = scmp.ne.s32.totalorder %s93, %s95
      %p99 = scmp.eq.s32.totalorder %s17, 0
      %p100 = por %p98, %p99
      %p101 = scmp.ne.s32.totalorder %s93, %s95
      %p102 = scmp.eq.s32.totalorder %s22, 2
      %p103 = por %p101, %p102
      %p104 = scmp.ne.s32.totalorder %s95, %s96
      %p105 = scmp.eq.s32.totalorder %s22, 0
      %p106 = por %p104, %p105
      %p107 = scmp.ne.s32.totalorder %s95, %s96
      %p108 = scmp.eq.s32.totalorder %s23, 2
      %p109 = por %p107, %p108
      %p111 = scmp.ne.s32.totalorder %s96, %s110
      %p112 = scmp.eq.s32.totalorder %s23, 0
      %p113 = por %p111, %p112
      %s114 = ssub.s32 %s17, %s24
      %p115 = scmp.eq.s32.totalorder %s114, 0
      %s117 = sadd.s32 %s116, 1
      %s118 = scalar_select %p115, %s116, %s117
      %p121 = pneg %p115
      %p122 = scmp.eq.s32.totalorder %s17, 2
      %p123 = por %p121, %p122
      %p124 = scmp.ne.s32.totalorder %s116, %s119
      %p125 = scmp.eq.s32.totalorder %s17, 0
      %p126 = por %p124, %p125
      %p127 = scmp.ne.s32.totalorder %s116, %s119
      %p128 = scmp.eq.s32.totalorder %s22, 2
      %p129 = por %p127, %p128
      %p130 = scmp.ne.s32.totalorder %s119, %s120
      %p131 = scmp.eq.s32.totalorder %s22, 0
      %p132 = por %p130, %p131
      %p133 = scmp.ne.s32.totalorder %s119, %s120
      %p134 = scmp.eq.s32.totalorder %s23, 2
      %p135 = por %p133, %p134
      %p137 = scmp.ne.s32.totalorder %s120, %s136
      %p138 = scmp.eq.s32.totalorder %s23, 0
      %p139 = por %p137, %p138
      %p140 = scmp.le.s32.totalorder 1, %s17
      %p141 = scmp.lt.s32.totalorder %s17, 4
      %p142 = pnand %p140, %p141
      %p143 = pneg %p142
      // Predicated region
      $region9: #{tpu_custom_call.1} parent=5 // pred_check
        _
      $region10: #{tpu_custom_call.1} parent=5 // pred_check_branch
        %145 = sbr.rel (%p142) target = $region12
      $region11: #{tpu_custom_call.1} parent=5 // pred_region
        %s146 = ssub.s32 %s17, 1
        // Predicated region
        $region13: #{tpu_custom_call.1} parent=11 // pred_check
          %p147 = pneg %p64
        $region14: #{tpu_custom_call.1} parent=11 // pred_check_branch
          %149 = sbr.rel (%p147) target = $region16
        $region15: #{tpu_custom_call.1} parent=11 // pred_region
          %s151 = ssub.s32 3072, 3072
          %152 = vsyncadd [#allocation6], %s151
          %s153 = sshll.u32 [#allocation5], 4
          %s154 = int_to_ptr.vmem [resolvable:$true] %s153
          %159 = dma.hbm_to_vmem [thread:$0]  %s1, 3072, %s154, [#allocation6], 64, 64, 4
        $region16: #{tpu_custom_call.1} parent=11 // pred_fallthru
          _
        // Predicated region
        $region17: #{tpu_custom_call.1} parent=11 // pred_check
          %p160 = pneg %p85
        $region18: #{tpu_custom_call.1} parent=11 // pred_check_branch
          %162 = sbr.rel (%p160) target = $region20
        $region19: #{tpu_custom_call.1} parent=11 // pred_region
          %s164 = ssub.s32 1024, 1024
          %165 = vsyncadd [#allocation6], %s164
          %s166 = sshll.u32 [#allocation7], 4
          %s167 = int_to_ptr.vmem [resolvable:$true] %s166
          %172 = dma.hbm_to_vmem [thread:$0]  %s2, 1024, %s167, [#allocation6], 64, 64, 4
        $region20: #{tpu_custom_call.1} parent=11 // pred_fallthru
          _
        // Predicated region
        $region21: #{tpu_custom_call.1} parent=11 // pred_check
          %p173 = pneg %p106
        $region22: #{tpu_custom_call.1} parent=11 // pred_check_branch
          %175 = sbr.rel (%p173) target = $region24
        $region23: #{tpu_custom_call.1} parent=11 // pred_region
          _
        $region24: #{tpu_custom_call.1} parent=11 // pred_fallthru
          _
      $region12: #{tpu_custom_call.1} parent=5 // pred_fallthru
        _
      %p176 = scmp.lt.s32.totalorder %s17, 3
      // Predicated region
      $region25: #{tpu_custom_call.1} parent=5 // pred_check
        %p177 = pneg %p176
      $region26: #{tpu_custom_call.1} parent=5 // pred_check_branch
        %179 = sbr.rel (%p177) target = $region28
      $region27: #{tpu_custom_call.1} parent=5 // pred_region
        // Predicated region
        $region29: #{tpu_custom_call.1} parent=27 // pred_check
          %p180 = pneg %p37
        $region30: #{tpu_custom_call.1} parent=27 // pred_check_branch
          %182 = sbr.rel (%p180) target = $region32
        $region31: #{tpu_custom_call.1} parent=27 // pred_region
          %s183 = sand.u32 %s27, 1
          %s184 = scalar_lea.sflag [#allocation3], %s183
          %s185 = sand.u32 %s27, 1
          %s186 = smul.addr %s185, 192
          %s187 = scalar_lea.vmem [#allocation2], %s186
          %s188 = smul.u32 16, %s17
          %s190 = ssub.s32 3072, 3072
          %191 = vsyncadd %s184, %s190
          %s192 = smul.addr %s188, 3
          %s193 = smul.addr %s192, 64
          %s194 = scalar_lea.hbm %s0, %s193
          %s195 = sshll.u32 %s187, 4
          %s196 = int_to_ptr.vmem [resolvable:$true] %s195
          %201 = dma.hbm_to_vmem [thread:$0]  %s194, 3072, %s196, %s184, 192, 192, 12
        $region32: #{tpu_custom_call.1} parent=27 // pred_fallthru
          _
      $region28: #{tpu_custom_call.1} parent=5 // pred_fallthru
        _
      %p202 = scmp.le.s32.totalorder 1, %s17
      %p203 = scmp.lt.s32.totalorder %s17, 4
      %p204 = pnand %p202, %p203
      %p205 = pneg %p204
      // Predicated region
      $region33: #{tpu_custom_call.1} parent=5 // pred_check
        _
      $region34: #{tpu_custom_call.1} parent=5 // pred_check_branch
        %207 = sbr.rel (%p204) target = $region36
      $region35: #{tpu_custom_call.1} parent=5 // pred_region
        %s208 = ssub.s32 %s17, 1
        %s209 = sand.u32 %s30, 1
        %s210 = scalar_lea.sflag [#allocation3], %s209
        %s211 = sand.u32 %s30, 1
        %s212 = smul.addr %s211, 192
        %s213 = scalar_lea.vmem [#allocation2], %s212
        // Predicated region
        $region37: #{tpu_custom_call.1} parent=35 // pred_check
          %p214 = pneg %p43
        $region38: #{tpu_custom_call.1} parent=35 // pred_check_branch
          %216 = sbr.rel (%p214) target = $region40
        $region39: #{tpu_custom_call.1} parent=35 // pred_region
          %217 = dma.done %s210, 3072
        $region40: #{tpu_custom_call.1} parent=35 // pred_fallthru
          _
        // Predicated region
        $region41: #{tpu_custom_call.1} parent=35 // pred_check
          %p218 = pneg %p64
        $region42: #{tpu_custom_call.1} parent=35 // pred_check_branch
          %220 = sbr.rel (%p218) target = $region44
        $region43: #{tpu_custom_call.1} parent=35 // pred_region
          %221 = dma.done [#allocation6], 3072
        $region44: #{tpu_custom_call.1} parent=35 // pred_fallthru
          _
        // Predicated region
        $region45: #{tpu_custom_call.1} parent=35 // pred_check
          %p222 = pneg %p85
        $region46: #{tpu_custom_call.1} parent=35 // pred_check_branch
          %224 = sbr.rel (%p222) target = $region48
        $region47: #{tpu_custom_call.1} parent=35 // pred_region
          %225 = dma.done [#allocation6], 1024
        $region48: #{tpu_custom_call.1} parent=35 // pred_fallthru
          _
        %s226 = sand.u32 %s30, 1
        %s227 = scalar_lea.sflag [#allocation3], %s226
        %s228 = sand.u32 %s30, 1
        %s229 = smul.addr %s228, 192
        %s230 = scalar_lea.vmem [#allocation2], %s229
        %p231 = pneg %p43
        %p232 = pneg %p40
        %p233 = pneg %p64
        %p234 = pneg %p61
        %p235 = pneg %p85
        %p236 = pneg %p82
        %p237 = pneg %p106
        %p238 = pneg %p103
        %p239 = pneg %p132
        %p240 = pneg %p129
        %s241 = sand.u32 %s119, 1
        %s242 = scalar_lea.sflag [#allocation4], %s241
        %s243 = sand.u32 %s119, 1
        %s244 = smul.addr %s243, 64
        %s245 = scalar_lea.vmem [#allocation8], %s244
        %s246 = smul.u32 16, %s22
        %s247 = smul.u32 16, %s22
        %v249 = vld [vmem:[%s213] sm:$0xff]
        %v250 = vld [vmem:[%s213 + $0x8] sm:$0xf]
        %v251 = vld [vmem:[%s213 + $0xc] sm:$0xff]
        %v252 = vld [vmem:[%s213 + $0x14] sm:$0xf]
        %v253 = vld [vmem:[%s213 + $0x18] sm:$0xff]
        %v254 = vld [vmem:[%s213 + $0x20] sm:$0xf]
        %v255 = vld [vmem:[%s213 + $0x24] sm:$0xff]
        %v256 = vld [vmem:[%s213 + $0x2c] sm:$0xf]
        %v257 = vld [vmem:[%s213 + $0x30] sm:$0xff]
        %v258 = vld [vmem:[%s213 + $0x38] sm:$0xf]
        %v259 = vld [vmem:[%s213 + $0x3c] sm:$0xff]
        %v260 = vld [vmem:[%s213 + $0x44] sm:$0xf]
        %v261 = vld [vmem:[%s213 + $0x48] sm:$0xff]
        %v262 = vld [vmem:[%s213 + $0x50] sm:$0xf]
        %v263 = vld [vmem:[%s213 + $0x54] sm:$0xff]
        %v264 = vld [vmem:[%s213 + $0x5c] sm:$0xf]
        %v265 = vld [vmem:[%s213 + $0x60] sm:$0xff]
        %v266 = vld [vmem:[%s213 + $0x68] sm:$0xf]
        %v267 = vld [vmem:[%s213 + $0x6c] sm:$0xff]
        %v268 = vld [vmem:[%s213 + $0x74] sm:$0xf]
        %v269 = vld [vmem:[%s213 + $0x78] sm:$0xff]
        %v270 = vld [vmem:[%s213 + $0x80] sm:$0xf]
        %v271 = vld [vmem:[%s213 + $0x84] sm:$0xff]
        %v272 = vld [vmem:[%s213 + $0x8c] sm:$0xf]
        %v273 = vld [vmem:[%s213 + $0x90] sm:$0xff]
        %v274 = vld [vmem:[%s213 + $0x98] sm:$0xf]
        %v275 = vld [vmem:[%s213 + $0x9c] sm:$0xff]
        %v276 = vld [vmem:[%s213 + $0xa4] sm:$0xf]
        %v277 = vld [vmem:[%s213 + $0xa8] sm:$0xff]
        %v278 = vld [vmem:[%s213 + $0xb0] sm:$0xf]
        %v279 = vld [vmem:[%s213 + $0xb4] sm:$0xff]
        %v280 = vld [vmem:[%s213 + $0xbc] sm:$0xf]
        %v281 = vld [vmem:[#allocation5] sm:$0xf]
        %v282 = vld [vmem:[#allocation5 + $0x4] sm:$0xf]
        %v283 = vld [vmem:[#allocation5 + $0x8] sm:$0xf]
        %v284 = vld [vmem:[#allocation5 + $0xc] sm:$0xf]
        %v285 = vld [vmem:[#allocation5 + $0x10] sm:$0xf]
        %v286 = vld [vmem:[#allocation5 + $0x14] sm:$0xf]
        %v287 = vld [vmem:[#allocation5 + $0x18] sm:$0xf]
        %v288 = vld [vmem:[#allocation5 + $0x1c] sm:$0xf]
        %v289 = vld [vmem:[#allocation5 + $0x20] sm:$0xf]
        %v290 = vld [vmem:[#allocation5 + $0x24] sm:$0xf]
        %v291 = vld [vmem:[#allocation5 + $0x28] sm:$0xf]
        %v292 = vld [vmem:[#allocation5 + $0x2c] sm:$0xf]
        %v293 = vld [vmem:[#allocation5 + $0x30] sm:$0xf]
        %v294 = vld [vmem:[#allocation5 + $0x34] sm:$0xf]
        %v295 = vld [vmem:[#allocation5 + $0x38] sm:$0xf]
        %v296 = vld [vmem:[#allocation5 + $0x3c] sm:$0xf]
        %v297 = vld [vmem:[#allocation5 + $0x40] sm:$0xf]
        %v298 = vld [vmem:[#allocation5 + $0x44] sm:$0xf]
        %v299 = vld [vmem:[#allocation5 + $0x48] sm:$0xf]
        %v300 = vld [vmem:[#allocation5 + $0x4c] sm:$0xf]
        %v301 = vld [vmem:[#allocation5 + $0x50] sm:$0xf]
        %v302 = vld [vmem:[#allocation5 + $0x54] sm:$0xf]
        %v303 = vld [vmem:[#allocation5 + $0x58] sm:$0xf]
        %v304 = vld [vmem:[#allocation5 + $0x5c] sm:$0xf]
        %v305 = vld [vmem:[#allocation5 + $0x60] sm:$0xf]
        %v306 = vld [vmem:[#allocation5 + $0x64] sm:$0xf]
        %v307 = vld [vmem:[#allocation5 + $0x68] sm:$0xf]
        %v308 = vld [vmem:[#allocation5 + $0x6c] sm:$0xf]
        %v309 = vld [vmem:[#allocation5 + $0x70] sm:$0xf]
        %v310 = vld [vmem:[#allocation5 + $0x74] sm:$0xf]
        %v311 = vld [vmem:[#allocation5 + $0x78] sm:$0xf]
        %v312 = vld [vmem:[#allocation5 + $0x7c] sm:$0xf]
        %v313 = vld [vmem:[#allocation5 + $0x80] sm:$0xf]
        %v314 = vld [vmem:[#allocation5 + $0x84] sm:$0xf]
        %v315 = vld [vmem:[#allocation5 + $0x88] sm:$0xf]
        %v316 = vld [vmem:[#allocation5 + $0x8c] sm:$0xf]
        %v317 = vld [vmem:[#allocation5 + $0x90] sm:$0xf]
        %v318 = vld [vmem:[#allocation5 + $0x94] sm:$0xf]
        %v319 = vld [vmem:[#allocation5 + $0x98] sm:$0xf]
        %v320 = vld [vmem:[#allocation5 + $0x9c] sm:$0xf]
        %v321 = vld [vmem:[#allocation5 + $0xa0] sm:$0xf]
        %v322 = vld [vmem:[#allocation5 + $0xa4] sm:$0xf]
        %v323 = vld [vmem:[#allocation5 + $0xa8] sm:$0xf]
        %v324 = vld [vmem:[#allocation5 + $0xac] sm:$0xf]
        %v325 = vld [vmem:[#allocation5 + $0xb0] sm:$0xf]
        %v326 = vld [vmem:[#allocation5 + $0xb4] sm:$0xf]
        %v327 = vld [vmem:[#allocation5 + $0xb8] sm:$0xf]
        %v328 = vld [vmem:[#allocation5 + $0xbc] sm:$0xf]
        %v361 = vunpack.c.l.b16 %v249
        %v362 = vunpack.c.h.b16 %v249
        %v363 = vunpack.c.l.b16 %v250
        %v364 = vunpack.c.l.b16 %v251
        %v365 = vunpack.c.h.b16 %v251
        %v366 = vunpack.c.l.b16 %v252
        %v367 = vunpack.c.l.b16 %v253
        %v368 = vunpack.c.h.b16 %v253
        %v369 = vunpack.c.l.b16 %v254
        %v370 = vunpack.c.l.b16 %v255
        %v371 = vunpack.c.h.b16 %v255
        %v372 = vunpack.c.l.b16 %v256
        %v373 = vunpack.c.l.b16 %v257
        %v374 = vunpack.c.h.b16 %v257
        %v375 = vunpack.c.l.b16 %v258
        %v376 = vunpack.c.l.b16 %v259
        %v377 = vunpack.c.h.b16 %v259
        %v378 = vunpack.c.l.b16 %v260
        %v379 = vunpack.c.l.b16 %v261
        %v380 = vunpack.c.h.b16 %v261
        %v381 = vunpack.c.l.b16 %v262
        %v382 = vunpack.c.l.b16 %v263
        %v383 = vunpack.c.h.b16 %v263
        %v384 = vunpack.c.l.b16 %v264
        %v385 = vunpack.c.l.b16 %v265
        %v386 = vunpack.c.h.b16 %v265
        %v387 = vunpack.c.l.b16 %v266
        %v388 = vunpack.c.l.b16 %v267
        %v389 = vunpack.c.h.b16 %v267
        %v390 = vunpack.c.l.b16 %v268
        %v391 = vunpack.c.l.b16 %v269
        %v392 = vunpack.c.h.b16 %v269
        %v393 = vunpack.c.l.b16 %v270
        %v394 = vunpack.c.l.b16 %v271
        %v395 = vunpack.c.h.b16 %v271
        %v396 = vunpack.c.l.b16 %v272
        %v397 = vunpack.c.l.b16 %v273
        %v398 = vunpack.c.h.b16 %v273
        %v399 = vunpack.c.l.b16 %v274
        %v400 = vunpack.c.l.b16 %v275
        %v401 = vunpack.c.h.b16 %v275
        %v402 = vunpack.c.l.b16 %v276
        %v403 = vunpack.c.l.b16 %v277
        %v404 = vunpack.c.h.b16 %v277
        %v405 = vunpack.c.l.b16 %v278
        %v406 = vunpack.c.l.b16 %v279
        %v407 = vunpack.c.h.b16 %v279
        %v408 = vunpack.c.l.b16 %v280
        %v409 = vpack.c.b16 %v364, %v361
        %v410 = vpack.c.b16 %v365, %v362
        %v411 = vpack.c.b16 %v366, %v363
        %v412 = vpack.c.b16 %v370, %v367
        %v413 = vpack.c.b16 %v371, %v368
        %v414 = vpack.c.b16 %v372, %v369
        %v415 = vpack.c.b16 %v376, %v373
        %v416 = vpack.c.b16 %v377, %v374
        %v417 = vpack.c.b16 %v378, %v375
        %v418 = vpack.c.b16 %v382, %v379
        %v419 = vpack.c.b16 %v383, %v380
        %v420 = vpack.c.b16 %v384, %v381
        %v421 = vpack.c.b16 %v388, %v385
        %v422 = vpack.c.b16 %v389, %v386
        %v423 = vpack.c.b16 %v390, %v387
        %v424 = vpack.c.b16 %v394, %v391
        %v425 = vpack.c.b16 %v395, %v392
        %v426 = vpack.c.b16 %v396, %v393
        %v427 = vpack.c.b16 %v400, %v397
        %v428 = vpack.c.b16 %v401, %v398
        %v429 = vpack.c.b16 %v402, %v399
        %v430 = vpack.c.b16 %v406, %v403
        %v431 = vpack.c.b16 %v407, %v404
        %v432 = vpack.c.b16 %v408, %v405
        %v505 = vunpack.c.l.b16 %v281
        %v506 = vunpack.c.l.b16 %v282
        %v507 = vunpack.c.l.b16 %v283
        %v508 = vunpack.c.l.b16 %v284
        %v509 = vunpack.c.l.b16 %v285
        %v510 = vunpack.c.l.b16 %v286
        %v511 = vunpack.c.l.b16 %v287
        %v512 = vunpack.c.l.b16 %v288
        %v513 = vunpack.c.l.b16 %v289
        %v514 = vunpack.c.l.b16 %v290
        %v515 = vunpack.c.l.b16 %v291
        %v516 = vunpack.c.l.b16 %v292
        %v517 = vunpack.c.l.b16 %v293
        %v518 = vunpack.c.l.b16 %v294
        %v519 = vunpack.c.l.b16 %v295
        %v520 = vunpack.c.l.b16 %v296
        %v521 = vunpack.c.l.b16 %v297
        %v522 = vunpack.c.l.b16 %v298
        %v523 = vunpack.c.l.b16 %v299
        %v524 = vunpack.c.l.b16 %v300
        %v525 = vunpack.c.l.b16 %v301
        %v526 = vunpack.c.l.b16 %v302
        %v527 = vunpack.c.l.b16 %v303
        %v528 = vunpack.c.l.b16 %v304
        %v529 = vunpack.c.l.b16 %v305
        %v530 = vunpack.c.l.b16 %v306
        %v531 = vunpack.c.l.b16 %v307
        %v532 = vunpack.c.l.b16 %v308
        %v533 = vunpack.c.l.b16 %v309
        %v534 = vunpack.c.l.b16 %v310
        %v535 = vunpack.c.l.b16 %v311
        %v536 = vunpack.c.l.b16 %v312
        %v537 = vunpack.c.l.b16 %v313
        %v538 = vunpack.c.l.b16 %v314
        %v539 = vunpack.c.l.b16 %v315
        %v540 = vunpack.c.l.b16 %v316
        %v541 = vunpack.c.l.b16 %v317
        %v542 = vunpack.c.l.b16 %v318
        %v543 = vunpack.c.l.b16 %v319
        %v544 = vunpack.c.l.b16 %v320
        %v545 = vunpack.c.l.b16 %v321
        %v546 = vunpack.c.l.b16 %v322
        %v547 = vunpack.c.l.b16 %v323
        %v548 = vunpack.c.l.b16 %v324
        %v549 = vunpack.c.l.b16 %v325
        %v550 = vunpack.c.l.b16 %v326
        %v551 = vunpack.c.l.b16 %v327
        %v552 = vunpack.c.l.b16 %v328
        %v553 = vpack.c.b16 %v506, %v505
        %v554 = vpack.c.b16 %v508, %v507
        %v555 = vpack.c.b16 %v510, %v509
        %v556 = vpack.c.b16 %v512, %v511
        %v557 = vpack.c.b16 %v514, %v513
        %v558 = vpack.c.b16 %v516, %v515
        %v559 = vpack.c.b16 %v518, %v517
        %v560 = vpack.c.b16 %v520, %v519
        %v561 = vpack.c.b16 %v522, %v521
        %v562 = vpack.c.b16 %v524, %v523
        %v563 = vpack.c.b16 %v526, %v525
        %v564 = vpack.c.b16 %v528, %v527
        %v565 = vpack.c.b16 %v530, %v529
        %v566 = vpack.c.b16 %v532, %v531
        %v567 = vpack.c.b16 %v534, %v533
        %v568 = vpack.c.b16 %v536, %v535
        %v569 = vpack.c.b16 %v538, %v537
        %v570 = vpack.c.b16 %v540, %v539
        %v571 = vpack.c.b16 %v542, %v541
        %v572 = vpack.c.b16 %v544, %v543
        %v573 = vpack.c.b16 %v546, %v545
        %v574 = vpack.c.b16 %v548, %v547
        %v575 = vpack.c.b16 %v550, %v549
        %v576 = vpack.c.b16 %v552, %v551
        %601 = vmatprep.subr.bf16.mxu0 0
        %602 = vmatpush1.bf16.msra.mxu0 %v553
        %603 = vmatprep.subr.bf16.mxu0 0
        %604 = vmatpush1.bf16.msra.mxu0 %v554
        %605 = vmatprep.subr.bf16.mxu0 0
        %606 = vmatpush1.bf16.msra.mxu0 %v555
        %607 = vmatprep.subr.bf16.mxu0 0
        %608 = vmatpush1.bf16.msra.mxu0 %v556
        %609 = vmatprep.subr.bf16.mxu0 0
        %610 = vmatpush1.bf16.msra.mxu0 %v557
        %611 = vmatprep.subr.bf16.mxu0 0
        %612 = vmatpush1.bf16.msra.mxu0 %v558
        %613 = vmatprep.subr.bf16.mxu0 0
        %614 = vmatpush1.bf16.msra.mxu0 %v559
        %615 = vmatprep.subr.bf16.mxu0 0
        %616 = vmatpush1.bf16.msra.mxu0 %v560
        %617 = vmatprep.subr.bf16.mxu0 0
        %618 = vmatpush1.bf16.msra.mxu0 %v561
        %619 = vmatprep.subr.bf16.mxu0 0
        %620 = vmatpush1.bf16.msra.mxu0 %v562
        %621 = vmatprep.subr.bf16.mxu0 0
        %622 = vmatpush1.bf16.msra.mxu0 %v563
        %623 = vmatprep.subr.bf16.mxu0 0
        %624 = vmatpush1.bf16.msra.mxu0 %v564
        %625 = vmatprep.subr.bf16.mxu0 0
        %626 = vmatpush1.bf16.msra.mxu0 %v565
        %627 = vmatprep.subr.bf16.mxu0 0
        %628 = vmatpush1.bf16.msra.mxu0 %v566
        %629 = vmatprep.subr.bf16.mxu0 0
        %630 = vmatpush1.bf16.msra.mxu0 %v567
        %631 = vmatprep.subr.bf16.mxu0 0
        %632 = vmatpush1.bf16.msra.mxu0 %v568
        %633 = vmatprep.mubr.bf16.mxu0 %v410
        %634 = vmatmul.mubr.bf16.gmra.mrb[0].mxu0 %v409
        %v635 = vpop.f32.mrb[0].mxu0
        %v636 = vadd.f32 0.0, %v635
        %v637 = vpop.f32.mrb[0].mxu0
        %v638 = vpop.f32.mrb[0].mxu0
        %v639 = vadd.f32 0.0, %v638
        %v640 = vpop.f32.mrb[0].mxu0
        %641 = vmatprep.mubr.bf16.mxu0 %v413
        %642 = vmatmul.mubr.bf16.gmra.mrb[0].mxu0 %v412
        %v643 = vpop.f32.mrb[0].mxu0
        %v644 = vadd.f32 0.0, %v643
        %v645 = vpop.f32.mrb[0].mxu0
        %v646 = vpop.f32.mrb[0].mxu0
        %v647 = vadd.f32 0.0, %v646
        %v648 = vpop.f32.mrb[0].mxu0
        %649 = vmatprep.mubr.bf16.mxu0 %v416
        %650 = vmatmul.mubr.bf16.gmra.mrb[0].mxu0 %v415
        %v651 = vpop.f32.mrb[0].mxu0
        %v652 = vadd.f32 0.0, %v651
        %v653 = vpop.f32.mrb[0].mxu0
        %v654 = vpop.f32.mrb[0].mxu0
        %v655 = vadd.f32 0.0, %v654
        %v656 = vpop.f32.mrb[0].mxu0
        %657 = vmatprep.mubr.bf16.mxu0 %v419
        %658 = vmatmul.mubr.bf16.gmra.mrb[0].mxu0 %v418
        %v659 = vpop.f32.mrb[0].mxu0
        %v660 = vadd.f32 0.0, %v659
        %v661 = vpop.f32.mrb[0].mxu0
        %v662 = vpop.f32.mrb[0].mxu0
        %v663 = vadd.f32 0.0, %v662
        %v664 = vpop.f32.mrb[0].mxu0
        %665 = vmatprep.mubr.bf16.mxu0 %v422
        %666 = vmatmul.mubr.bf16.gmra.mrb[0].mxu0 %v421
        %v667 = vpop.f32.mrb[0].mxu0
        %v668 = vadd.f32 0.0, %v667
        %v669 = vpop.f32.mrb[0].mxu0
        %v670 = vpop.f32.mrb[0].mxu0
        %v671 = vadd.f32 0.0, %v670
        %v672 = vpop.f32.mrb[0].mxu0
        %673 = vmatprep.mubr.bf16.mxu0 %v425
        %674 = vmatmul.mubr.bf16.gmra.mrb[0].mxu0 %v424
        %v675 = vpop.f32.mrb[0].mxu0
        %v676 = vadd.f32 0.0, %v675
        %v677 = vpop.f32.mrb[0].mxu0
        %v678 = vpop.f32.mrb[0].mxu0
        %v679 = vadd.f32 0.0, %v678
        %v680 = vpop.f32.mrb[0].mxu0
        %681 = vmatprep.mubr.bf16.mxu0 %v428
        %682 = vmatmul.mubr.bf16.gmra.mrb[0].mxu0 %v427
        %v683 = vpop.f32.mrb[0].mxu0
        %v684 = vadd.f32 0.0, %v683
        %v685 = vpop.f32.mrb[0].mxu0
        %v686 = vpop.f32.mrb[0].mxu0
        %v687 = vadd.f32 0.0, %v686
        %v688 = vpop.f32.mrb[0].mxu0
        %689 = vmatprep.mubr.bf16.mxu0 %v431
        %690 = vmatmul.mubr.bf16.gmra.mrb[0].mxu0 %v430
        %v691 = vpop.f32.mrb[0].mxu0
        %v692 = vadd.f32 0.0, %v691
        %v693 = vpop.f32.mrb[0].mxu0
        %v694 = vpop.f32.mrb[0].mxu0
        %v695 = vadd.f32 0.0, %v694
        %v696 = vpop.f32.mrb[0].mxu0
        %697 = vdwg.mxu0
        %698 = vmatprep.subr.bf16.mxu0 0
        %699 = vmatpush1.bf16.msra.mxu0 %v569
        %700 = vmatprep.subr.bf16.mxu0 0
        %701 = vmatpush1.bf16.msra.mxu0 %v570
        %702 = vmatprep.subr.bf16.mxu0 0
        %703 = vmatpush1.bf16.msra.mxu0 %v571
        %704 = vmatprep.subr.bf16.mxu0 0
        %705 = vmatpush1.bf16.msra.mxu0 %v572
        %706 = vmatprep.subr.bf16.mxu0 0
        %707 = vmatpush1.bf16.msra.mxu0 %v573
        %708 = vmatprep.subr.bf16.mxu0 0
        %709 = vmatpush1.bf16.msra.mxu0 %v574
        %710 = vmatprep.subr.bf16.mxu0 0
        %711 = vmatpush1.bf16.msra.mxu0 %v575
        %712 = vmatprep.subr.bf16.mxu0 0
        %713 = vmatpush1.bf16.msra.mxu0 %v576
        %714 = vmatprep.subr.bf16.mxu0 0
        %715 = vmatpush1.bf16.msra.mxu0 0
        %716 = vmatprep.subr.bf16.mxu0 0
        %717 = vmatpush1.bf16.msra.mxu0 0
        %718 = vmatprep.subr.bf16.mxu0 0
        %719 = vmatpush1.bf16.msra.mxu0 0
        %720 = vmatprep.subr.bf16.mxu0 0
        %721 = vmatpush1.bf16.msra.mxu0 0
        %722 = vmatprep.subr.bf16.mxu0 0
        %723 = vmatpush1.bf16.msra.mxu0 0
        %724 = vmatprep.subr.bf16.mxu0 0
        %725 = vmatpush1.bf16.msra.mxu0 0
        %726 = vmatprep.subr.bf16.mxu0 0
        %727 = vmatpush1.bf16.msra.mxu0 0
        %728 = vmatprep.subr.bf16.mxu0 0
        %729 = vmatpush1.bf16.msra.mxu0 0
        %730 = vmatprep.mubr.bf16.mxu0 0
        %731 = vmatmul.mubr.bf16.gmra.mrb[0].mxu0 %v411
        %v732 = vpop.f32.mrb[0].mxu0
        %v733 = vadd.f32 %v636, %v732
        %v734 = vpop.f32.mrb[0].mxu0
        %v735 = vpop.f32.mrb[0].mxu0
        %v736 = vadd.f32 %v639, %v735
        %v737 = vpop.f32.mrb[0].mxu0
        %738 = vmatprep.mubr.bf16.mxu0 0
        %739 = vmatmul.mubr.bf16.gmra.mrb[0].mxu0 %v414
        %v740 = vpop.f32.mrb[0].mxu0
        %v741 = vadd.f32 %v644, %v740
        %v742 = vpop.f32.mrb[0].mxu0
        %v743 = vpop.f32.mrb[0].mxu0
        %v744 = vadd.f32 %v647, %v743
        %v745 = vpop.f32.mrb[0].mxu0
        %746 = vmatprep.mubr.bf16.mxu0 0
        %747 = vmatmul.mubr.bf16.gmra.mrb[0].mxu0 %v417
        %v748 = vpop.f32.mrb[0].mxu0
        %v749 = vadd.f32 %v652, %v748
        %v750 = vpop.f32.mrb[0].mxu0
        %v751 = vpop.f32.mrb[0].mxu0
        %v752 = vadd.f32 %v655, %v751
        %v753 = vpop.f32.mrb[0].mxu0
        %754 = vmatprep.mubr.bf16.mxu0 0
        %755 = vmatmul.mubr.bf16.gmra.mrb[0].mxu0 %v420
        %v756 = vpop.f32.mrb[0].mxu0
        %v757 = vadd.f32 %v660, %v756
        %v758 = vpop.f32.mrb[0].mxu0
        %v759 = vpop.f32.mrb[0].mxu0
        %v760 = vadd.f32 %v663, %v759
        %v761 = vpop.f32.mrb[0].mxu0
        %762 = vmatprep.mubr.bf16.mxu0 0
        %763 = vmatmul.mubr.bf16.gmra.mrb[0].mxu0 %v423
        %v764 = vpop.f32.mrb[0].mxu0
        %v765 = vadd.f32 %v668, %v764
        %v766 = vpop.f32.mrb[0].mxu0
        %v767 = vpop.f32.mrb[0].mxu0
        %v768 = vadd.f32 %v671, %v767
        %v769 = vpop.f32.mrb[0].mxu0
        %770 = vmatprep.mubr.bf16.mxu0 0
        %771 = vmatmul.mubr.bf16.gmra.mrb[0].mxu0 %v426
        %v772 = vpop.f32.mrb[0].mxu0
        %v773 = vadd.f32 %v676, %v772
        %v774 = vpop.f32.mrb[0].mxu0
        %v775 = vpop.f32.mrb[0].mxu0
        %v776 = vadd.f32 %v679, %v775
        %v777 = vpop.f32.mrb[0].mxu0
        %778 = vmatprep.mubr.bf16.mxu0 0
        %779 = vmatmul.mubr.bf16.gmra.mrb[0].mxu0 %v429
        %v780 = vpop.f32.mrb[0].mxu0
        %v781 = vadd.f32 %v684, %v780
        %v782 = vpop.f32.mrb[0].mxu0
        %v783 = vpop.f32.mrb[0].mxu0
        %v784 = vadd.f32 %v687, %v783
        %v785 = vpop.f32.mrb[0].mxu0
        %786 = vmatprep.mubr.bf16.mxu0 0
        %787 = vmatmul.mubr.bf16.gmra.mrb[0].mxu0 %v432
        %v788 = vpop.f32.mrb[0].mxu0
        %v789 = vadd.f32 %v692, %v788
        %v790 = vpop.f32.mrb[0].mxu0
        %v791 = vpop.f32.mrb[0].mxu0
        %v792 = vadd.f32 %v695, %v791
        %v793 = vpop.f32.mrb[0].mxu0
        %794 = vdwg.mxu0
        %v795 = vpack.c.bf16 %v736, %v733
        %v796 = vpack.c.bf16 %v744, %v741
        %v797 = vpack.c.bf16 %v752, %v749
        %v798 = vpack.c.bf16 %v760, %v757
        %v799 = vpack.c.bf16 %v768, %v765
        %v800 = vpack.c.bf16 %v776, %v773
        %v801 = vpack.c.bf16 %v784, %v781
        %v802 = vpack.c.bf16 %v792, %v789
        %v803 = vld [vmem:[#allocation7] sm:$0xf]
        %v804 = vld [vmem:[#allocation7 + $0x4] sm:$0xf]
        %v805 = vld [vmem:[#allocation7 + $0x8] sm:$0xf]
        %v806 = vld [vmem:[#allocation7 + $0xc] sm:$0xf]
        %v807 = vld [vmem:[#allocation7 + $0x10] sm:$0xf]
        %v808 = vld [vmem:[#allocation7 + $0x14] sm:$0xf]
        %v809 = vld [vmem:[#allocation7 + $0x18] sm:$0xf]
        %v810 = vld [vmem:[#allocation7 + $0x1c] sm:$0xf]
        %v811 = vld [vmem:[#allocation7 + $0x20] sm:$0xf]
        %v812 = vld [vmem:[#allocation7 + $0x24] sm:$0xf]
        %v813 = vld [vmem:[#allocation7 + $0x28] sm:$0xf]
        %v814 = vld [vmem:[#allocation7 + $0x2c] sm:$0xf]
        %v815 = vld [vmem:[#allocation7 + $0x30] sm:$0xf]
        %v816 = vld [vmem:[#allocation7 + $0x34] sm:$0xf]
        %v817 = vld [vmem:[#allocation7 + $0x38] sm:$0xf]
        %v818 = vld [vmem:[#allocation7 + $0x3c] sm:$0xf]
        %v819 = vld [vmem:[%s3] sm:$0x1]
        %v821 = vlaneseq
        %v822 = vshrl.u32 %v821, 7
        %v823 = vsub.s32 0, %v822
        %v824 = vrot.slane %v819, %v823
        %v842 = vunpack.c.l.b16 %v803
        %v843 = vunpack.c.l.b16 %v804
        %v844 = vunpack.c.l.b16 %v805
        %v845 = vunpack.c.l.b16 %v806
        %v846 = vunpack.c.l.b16 %v807
        %v847 = vunpack.c.l.b16 %v808
        %v848 = vunpack.c.l.b16 %v809
        %v849 = vunpack.c.l.b16 %v810
        %v850 = vunpack.c.l.b16 %v811
        %v851 = vunpack.c.l.b16 %v812
        %v852 = vunpack.c.l.b16 %v813
        %v853 = vunpack.c.l.b16 %v814
        %v854 = vunpack.c.l.b16 %v815
        %v855 = vunpack.c.l.b16 %v816
        %v856 = vunpack.c.l.b16 %v817
        %v857 = vunpack.c.l.b16 %v818
        %v858 = vpack.c.b16 %v843, %v842
        %v859 = vpack.c.b16 %v845, %v844
        %v860 = vpack.c.b16 %v847, %v846
        %v861 = vpack.c.b16 %v849, %v848
        %v862 = vpack.c.b16 %v851, %v850
        %v863 = vpack.c.b16 %v853, %v852
        %v864 = vpack.c.b16 %v855, %v854
        %v865 = vpack.c.b16 %v857, %v856
        %874 = vmatprep.subr.bf16.mxu0 0
        %875 = vmatpush1.bf16.msra.mxu0 %v858
        %876 = vmatprep.subr.bf16.mxu0 0
        %877 = vmatpush1.bf16.msra.mxu0 %v859
        %878 = vmatprep.subr.bf16.mxu0 0
        %879 = vmatpush1.bf16.msra.mxu0 %v860
        %880 = vmatprep.subr.bf16.mxu0 0
        %881 = vmatpush1.bf16.msra.mxu0 %v861
        %882 = vmatprep.subr.bf16.mxu0 0
        %883 = vmatpush1.bf16.msra.mxu0 %v862
        %884 = vmatprep.subr.bf16.mxu0 0
        %885 = vmatpush1.bf16.msra.mxu0 %v863
        %886 = vmatprep.subr.bf16.mxu0 0
        %887 = vmatpush1.bf16.msra.mxu0 %v864
        %888 = vmatprep.subr.bf16.mxu0 0
        %889 = vmatpush1.bf16.msra.mxu0 %v865
        %890 = vmatprep.subr.bf16.mxu0 0
        %891 = vmatpush1.bf16.msra.mxu0 0
        %892 = vmatprep.subr.bf16.mxu0 0
        %893 = vmatpush1.bf16.msra.mxu0 0
        %894 = vmatprep.subr.bf16.mxu0 0
        %895 = vmatpush1.bf16.msra.mxu0 0
        %896 = vmatprep.subr.bf16.mxu0 0
        %897 = vmatpush1.bf16.msra.mxu0 0
        %898 = vmatprep.subr.bf16.mxu0 0
        %899 = vmatpush1.bf16.msra.mxu0 0
        %900 = vmatprep.subr.bf16.mxu0 0
        %901 = vmatpush1.bf16.msra.mxu0 0
        %902 = vmatprep.subr.bf16.mxu0 0
        %903 = vmatpush1.bf16.msra.mxu0 0
        %904 = vmatprep.subr.bf16.mxu0 0
        %905 = vmatpush1.bf16.msra.mxu0 0
        %906 = vmatprep.mubr.bf16.mxu0 0
        %907 = vmatmul.mubr.bf16.gmra.mrb[0].mxu0 %v795
        %v908 = vpop.f32.mrb[0].mxu0
        %v909 = vadd.f32 %v824, %v908
        %v910 = vpop.f32.mrb[0].mxu0
        %v911 = vpop.f32.mrb[0].mxu0
        %v912 = vadd.f32 %v824, %v911
        %v913 = vpop.f32.mrb[0].mxu0
        %914 = vmatprep.mubr.bf16.mxu0 0
        %915 = vmatmul.mubr.bf16.gmra.mrb[0].mxu0 %v796
        %v916 = vpop.f32.mrb[0].mxu0
        %v917 = vadd.f32 %v824, %v916
        %v918 = vpop.f32.mrb[0].mxu0
        %v919 = vpop.f32.mrb[0].mxu0
        %v920 = vadd.f32 %v824, %v919
        %v921 = vpop.f32.mrb[0].mxu0
        %922 = vmatprep.mubr.bf16.mxu0 0
        %923 = vmatmul.mubr.bf16.gmra.mrb[0].mxu0 %v797
        %v924 = vpop.f32.mrb[0].mxu0
        %v925 = vadd.f32 %v824, %v924
        %v926 = vpop.f32.mrb[0].mxu0
        %v927 = vpop.f32.mrb[0].mxu0
        %v928 = vadd.f32 %v824, %v927
        %v929 = vpop.f32.mrb[0].mxu0
        %930 = vmatprep.mubr.bf16.mxu0 0
        %931 = vmatmul.mubr.bf16.gmra.mrb[0].mxu0 %v798
        %v932 = vpop.f32.mrb[0].mxu0
        %v933 = vadd.f32 %v824, %v932
        %v934 = vpop.f32.mrb[0].mxu0
        %v935 = vpop.f32.mrb[0].mxu0
        %v936 = vadd.f32 %v824, %v935
        %v937 = vpop.f32.mrb[0].mxu0
        %938 = vmatprep.mubr.bf16.mxu0 0
        %939 = vmatmul.mubr.bf16.gmra.mrb[0].mxu0 %v799
        %v940 = vpop.f32.mrb[0].mxu0
        %v941 = vadd.f32 %v824, %v940
        %v942 = vpop.f32.mrb[0].mxu0
        %v943 = vpop.f32.mrb[0].mxu0
        %v944 = vadd.f32 %v824, %v943
        %v945 = vpop.f32.mrb[0].mxu0
        %946 = vmatprep.mubr.bf16.mxu0 0
        %947 = vmatmul.mubr.bf16.gmra.mrb[0].mxu0 %v800
        %v948 = vpop.f32.mrb[0].mxu0
        %v949 = vadd.f32 %v824, %v948
        %v950 = vpop.f32.mrb[0].mxu0
        %v951 = vpop.f32.mrb[0].mxu0
        %v952 = vadd.f32 %v824, %v951
        %v953 = vpop.f32.mrb[0].mxu0
        %954 = vmatprep.mubr.bf16.mxu0 0
        %955 = vmatmul.mubr.bf16.gmra.mrb[0].mxu0 %v801
        %v956 = vpop.f32.mrb[0].mxu0
        %v957 = vadd.f32 %v824, %v956
        %v958 = vpop.f32.mrb[0].mxu0
        %v959 = vpop.f32.mrb[0].mxu0
        %v960 = vadd.f32 %v824, %v959
        %v961 = vpop.f32.mrb[0].mxu0
        %962 = vmatprep.mubr.bf16.mxu0 0
        %963 = vmatmul.mubr.bf16.gmra.mrb[0].mxu0 %v802
        %v964 = vpop.f32.mrb[0].mxu0
        %v965 = vadd.f32 %v824, %v964
        %v966 = vpop.f32.mrb[0].mxu0
        %v967 = vpop.f32.mrb[0].mxu0
        %v968 = vadd.f32 %v824, %v967
        %v969 = vpop.f32.mrb[0].mxu0
        %970 = vdwg.mxu0
        %v971 = vmax.f32 %v909, 0.0
        %v972 = vmax.f32 %v912, 0.0
        %v973 = vmax.f32 %v917, 0.0
        %v974 = vmax.f32 %v920, 0.0
        %v975 = vmax.f32 %v925, 0.0
        %v976 = vmax.f32 %v928, 0.0
        %v977 = vmax.f32 %v933, 0.0
        %v978 = vmax.f32 %v936, 0.0
        %v979 = vmax.f32 %v941, 0.0
        %v980 = vmax.f32 %v944, 0.0
        %v981 = vmax.f32 %v949, 0.0
        %v982 = vmax.f32 %v952, 0.0
        %v983 = vmax.f32 %v957, 0.0
        %v984 = vmax.f32 %v960, 0.0
        %v985 = vmax.f32 %v965, 0.0
        %v986 = vmax.f32 %v968, 0.0
        %v987 = vpack.c.bf16 %v972, %v971
        %v988 = vpack.c.bf16 %v974, %v973
        %v989 = vpack.c.bf16 %v976, %v975
        %v990 = vpack.c.bf16 %v978, %v977
        %v991 = vpack.c.bf16 %v980, %v979
        %v992 = vpack.c.bf16 %v982, %v981
        %v993 = vpack.c.bf16 %v984, %v983
        %v994 = vpack.c.bf16 %v986, %v985
        %v1003 = vunpack.c.l.b16 %v987
        %v1004 = vunpack.c.h.b16 %v987
        %v1005 = vunpack.c.l.b16 %v988
        %v1006 = vunpack.c.h.b16 %v988
        %v1007 = vunpack.c.l.b16 %v989
        %v1008 = vunpack.c.h.b16 %v989
        %v1009 = vunpack.c.l.b16 %v990
        %v1010 = vunpack.c.h.b16 %v990
        %v1011 = vunpack.c.l.b16 %v991
        %v1012 = vunpack.c.h.b16 %v991
        %v1013 = vunpack.c.l.b16 %v992
        %v1014 = vunpack.c.h.b16 %v992
        %v1015 = vunpack.c.l.b16 %v993
        %v1016 = vunpack.c.h.b16 %v993
        %v1017 = vunpack.c.l.b16 %v994
        %v1018 = vunpack.c.h.b16 %v994
        %v1019 = vpack.c.b16 %v1003, %v1003
        %v1020 = vpack.c.b16 %v1004, %v1004
        %v1021 = vpack.c.b16 %v1005, %v1005
        %v1022 = vpack.c.b16 %v1006, %v1006
        %v1023 = vpack.c.b16 %v1007, %v1007
        %v1024 = vpack.c.b16 %v1008, %v1008
        %v1025 = vpack.c.b16 %v1009, %v1009
        %v1026 = vpack.c.b16 %v1010, %v1010
        %v1027 = vpack.c.b16 %v1011, %v1011
        %v1028 = vpack.c.b16 %v1012, %v1012
        %v1029 = vpack.c.b16 %v1013, %v1013
        %v1030 = vpack.c.b16 %v1014, %v1014
        %v1031 = vpack.c.b16 %v1015, %v1015
        %v1032 = vpack.c.b16 %v1016, %v1016
        %v1033 = vpack.c.b16 %v1017, %v1017
        %v1034 = vpack.c.b16 %v1018, %v1018
        %1051 = vst [vmem:[%s245] sm:$0xf] %v1019
        %1052 = vst [vmem:[%s245 + $0x4] sm:$0xf] %v1020
        %1053 = vst [vmem:[%s245 + $0x8] sm:$0xf] %v1021
        %1054 = vst [vmem:[%s245 + $0xc] sm:$0xf] %v1022
        %1055 = vst [vmem:[%s245 + $0x10] sm:$0xf] %v1023
        %1056 = vst [vmem:[%s245 + $0x14] sm:$0xf] %v1024
        %1057 = vst [vmem:[%s245 + $0x18] sm:$0xf] %v1025
        %1058 = vst [vmem:[%s245 + $0x1c] sm:$0xf] %v1026
        %1059 = vst [vmem:[%s245 + $0x20] sm:$0xf] %v1027
        %1060 = vst [vmem:[%s245 + $0x24] sm:$0xf] %v1028
        %1061 = vst [vmem:[%s245 + $0x28] sm:$0xf] %v1029
        %1062 = vst [vmem:[%s245 + $0x2c] sm:$0xf] %v1030
        %1063 = vst [vmem:[%s245 + $0x30] sm:$0xf] %v1031
        %1064 = vst [vmem:[%s245 + $0x34] sm:$0xf] %v1032
        %1065 = vst [vmem:[%s245 + $0x38] sm:$0xf] %v1033
        %1066 = vst [vmem:[%s245 + $0x3c] sm:$0xf] %v1034
        %s1067 = sand.u32 %s119, 1
        %s1068 = scalar_lea.sflag [#allocation4], %s1067
        %s1069 = sand.u32 %s119, 1
        %s1070 = smul.addr %s1069, 64
        %s1071 = scalar_lea.vmem [#allocation8], %s1070
        // Predicated region
        $region49: #{tpu_custom_call.1} parent=35 // pred_check
          %p1072 = pneg %p129
        $region50: #{tpu_custom_call.1} parent=35 // pred_check_branch
          %1074 = sbr.rel (%p1072) target = $region52
        $region51: #{tpu_custom_call.1} parent=35 // pred_region
          %s1075 = smul.u32 16, %s22
          %s1077 = ssub.s32 1024, 1024
          %1078 = vsyncadd %s1068, %s1077
          %s1079 = smul.addr %s1075, 64
          %s1080 = scalar_lea.hbm %s4, %s1079
          %s1081 = sshll.u32 %s1071, 4
          %s1082 = int_to_ptr.vmem [resolvable:$true] %s1081
          %1087 = dma.vmem_to_hbm [thread:$0]  %s1082, 1024, %s1080, %s1068, 64, 64, 4
        $region52: #{tpu_custom_call.1} parent=35 // pred_fallthru
          _
      $region36: #{tpu_custom_call.1} parent=5 // pred_fallthru
        _
      %p1088 = scmp.le.s32.totalorder 2, %s17
      // Predicated region
      $region53: #{tpu_custom_call.1} parent=5 // pred_check
        %p1089 = pneg %p1088
      $region54: #{tpu_custom_call.1} parent=5 // pred_check_branch
        %1091 = sbr.rel (%p1089) target = $region56
      $region55: #{tpu_custom_call.1} parent=5 // pred_region
        %s1092 = ssub.s32 %s17, 2
        // Predicated region
        $region57: #{tpu_custom_call.1} parent=55 // pred_check
          %p1093 = pneg %p135
        $region58: #{tpu_custom_call.1} parent=55 // pred_check_branch
          %1095 = sbr.rel (%p1093) target = $region60
        $region59: #{tpu_custom_call.1} parent=55 // pred_region
          %s1096 = sand.u32 %s120, 1
          %s1097 = scalar_lea.sflag [#allocation4], %s1096
          %s1098 = sand.u32 %s120, 1
          %s1099 = smul.addr %s1098, 64
          %s1100 = scalar_lea.vmem [#allocation8], %s1099
          %1101 = dma.done %s1097, 1024
        $region60: #{tpu_custom_call.1} parent=55 // pred_fallthru
          _
      $region56: #{tpu_custom_call.1} parent=5 // pred_fallthru
        _
    $region6: #{tpu_custom_call.1} parent=1 // loop_footer
      %s21 = sadd.s32 1, %s17
    $region7: #{tpu_custom_call.1} parent=1 // loop_footer_branch
      %16 = sbr.rel target = $region3
    $region8: #{tpu_custom_call.1} parent=1 // loop_exit
      _
    %1102 = vsyncpa [#allocation3], 1
    %s1103 = scalar_lea.sflag [#allocation3], 1
    %1104 = vsyncpa %s1103, 1
    %1105 = vsyncpa [#allocation6], 1
    %1106 = vsyncpa [#allocation4], 1
    %s1107 = scalar_lea.sflag [#allocation4], 1
    %1108 = vsyncpa %s1107, 1

</llo_original>
